<compile_context>
chip_gen: v7x
topology: tpu7x:2x2x1
jax: 0.10.0
libtpu: 0.0.40
codegen_flags: <defaults>
</compile_context>

<pallas_src>
import math

import jax
import jax.numpy as jnp
from jax import lax
from jax.experimental import pallas as pl
from jax.experimental.pallas import tpu as pltpu


def _round_up(x, m):
    return ((x + m - 1) // m) * m


# ~4 MiB per streamed input buffer (x2 for double buffering).  Together with the
# small transposed output buffers this fits v5e's 16 MiB default scoped-VMEM limit
# and leaves ample headroom on v6e (32 MiB default) and v7x (64 MiB physical).
_INPUT_BUF_BYTES = 4 << 20


# ---------------------------------------------------------------------------
# Kernel (shared by the packed and general paths)
# ---------------------------------------------------------------------------

def _linear_relu_kernel(x_ref, wt_ref, o_ref):
    """o[q, j] = relu(sum_f wt[q, f] * x[j, f]).

    x_ref : (tile, F)  activations at their native dtype (no in-kernel upcast)
    wt_ref: (P, F)     resident weight, same dtype as x
    o_ref : (P, tile)  transposed, lane-dense output (f32)
    """
    y = lax.dot_general(
        wt_ref[...], x_ref[...],
        dimension_numbers=(((1,), (1,)), ((), ())),   # contract over F ("NT" matmul)
        preferred_element_type=jnp.float32)
    o_ref[...] = jnp.maximum(y, 0.0).astype(o_ref.dtype)   # ReLU


# ---------------------------------------------------------------------------
# Tiling / call helpers
# ---------------------------------------------------------------------------

def _pick_tile(n_rows, row_bytes, min_steps=2):
    """Row-tile size: ~_INPUT_BUF_BYTES per buffer, at least `min_steps` grid steps
    when the batch allows it (v7x has 2 TensorCores), 128-aligned (valid sublane
    tiling for f32/bf16/int8 inputs and valid lane tiling for the (P, tile) output
    block).  If everything fits in one block, use the exact array extent so every
    BlockSpec dim equals the full array dim."""
    budget = max(128, (_INPUT_BUF_BYTES // max(row_bytes, 1)) // 128 * 128)
    tile = min(budget, _round_up(pl.cdiv(n_rows, min_steps), 128))
    if tile >= n_rows:
        return n_rows
    return tile


def _call(x2d, wt, tile):
    """x2d (N, F) @ wt (P, F)^T with ReLU -> out (P, N) f32, streamed over N."""
    n, f = x2d.shape
    p = wt.shape[0]
    isz = x2d.dtype.itemsize
    return pl.pallas_call(
        _linear_relu_kernel,
        out_shape=jax.ShapeDtypeStruct((p, n), jnp.float32),
        grid=(pl.cdiv(n, tile),),
        in_specs=[
            pl.BlockSpec((tile, f), lambda i: (i, 0)),
            pl.BlockSpec((p, f), lambda i: (0, 0)),   # constant index -> DMA'd once
        ],
        out_specs=pl.BlockSpec((p, tile), lambda i: (0, i)),
        compiler_params=pltpu.CompilerParams(
            # Independent row blocks -> shard grid steps across both TCs on v7x.
            dimension_semantics=("parallel",)),
        cost_estimate=pl.CostEstimate(
            flops=2 * n * f * p,
            transcendentals=0,
            bytes_accessed=n * f * isz + p * f * isz + p * n * 4),
    )(x2d, wt)


# ---------------------------------------------------------------------------
# Wrappers
# ---------------------------------------------------------------------------

def _forward_packed(x2d, w):
    """128 % k == 0 and batch % (128//k) == 0: zero-copy lane packing.

    Every vreg lane carries useful data; one small resident-weight MXU matmul does
    the weighted sum AND the P-way segment reduction, and emits a lane-dense
    transposed output."""
    b, k = x2d.shape
    p = 128 // k
    r = b // p
    x_packed = x2d.reshape(r, 128)                  # free row-major re-view

    # Transposed segmented weight: wt[q, l] = w[l % k] if l // k == q else 0.
    lane = jnp.arange(128)
    w_rep = jnp.tile(w.reshape(-1), p)                                   # (128,)
    wt = jnp.where((lane // k)[None, :] == jnp.arange(p)[:, None],
                   w_rep[None, :], 0).astype(x2d.dtype)                  # (p, 128)

    tile = _pick_tile(r, 128 * x2d.dtype.itemsize)
    out = _call(x_packed, wt, tile)                 # (p, r), out[q, j] = y[j*p + q]
    return out.reshape(b) if p == 1 else out.T.reshape(b)   # tiny (b-element) fixup


def _forward_general(x2d, w):
    """General path: stream the (B, K) rows as-is (no pad/copy), contract on the
    MXU, lane-dense (1, tile) output."""
    b, k = x2d.shape
    wt = w.reshape(1, k).astype(x2d.dtype)
    # VMEM lane dim is padded to a multiple of 128 -> budget on padded row bytes.
    tile = _pick_tile(b, _round_up(k, 128) * x2d.dtype.itemsize)
    out = _call(x2d, wt, tile)                      # (1, b)
    return out.reshape(b)


def device_conditioner(x, weight):
    """x: [..., n_inputs]; weight: [1, n_inputs] (PyTorch nn.Linear layout).
    Returns ReLU(x @ weight.T) with shape [..., 1], float32.

    bf16 activations are supported end-to-end (half the HBM traffic); the weight is
    cast to the activation dtype and accumulation is f32 on the MXU."""
    orig_shape = x.shape
    k = orig_shape[-1]
    b = math.prod(orig_shape[:-1])
    x2d = x.reshape(b, k)
    w = jnp.asarray(weight).reshape(1, k)

    if k <= 128 and 128 % k == 0 and b % (128 // k) == 0:
        out_flat = _forward_packed(x2d, w)          # zero-copy lane packing
    else:
        out_flat = _forward_general(x2d, w)         # zero-copy row streaming
    return out_flat.reshape(orig_shape[:-1] + (1,))


# ---------------------------------------------------------------------------
# Reference + self-test
# ---------------------------------------------------------------------------

def _reference(x, weight):
    w = weight.reshape(1, -1).astype(jnp.float32)
    y = jnp.sum(x.astype(jnp.float32) * w, axis=-1, keepdims=True)
    return jnp.maximum(y, 0.0)


if __name__ == "__main__":
    key = jax.random.PRNGKey(0)
    ks = jax.random.split(key, 8)

    def snap(a):
        # Snap values onto the bf16 grid so the MXU's f32 decomposition (and the
        # bf16 path) match the f32 reference up to accumulation-order noise only.
        return a.astype(jnp.bfloat16).astype(jnp.float32)

    def check(x, w, atol=2e-3, rtol=1e-3):
        y = jax.block_until_ready(device_conditioner(x, w))
        y_ref = _reference(x, w)
        assert y.shape == x.shape[:-1] + (1,), y.shape
        err = float(jnp.max(jnp.abs(y.astype(jnp.float32) - y_ref)))
        assert jnp.allclose(y.astype(jnp.float32), y_ref, atol=atol, rtol=rtol), err

    # 1) Packed path, single full block: n_inputs=32 divides 128, batch % 4 == 0.
    x1 = snap(jax.random.normal(ks[0], (2, 8, 32), dtype=jnp.float32))
    w1 = snap(2.0 + 1.5 * jax.random.normal(ks[1], (1, 32), dtype=jnp.float32))
    check(x1, w1)

    # 2) General path (k=48 does not divide 128), multi-step grid + partial block.
    x2 = snap(jax.random.normal(ks[2], (5, 120, 48), dtype=jnp.float32))
    w2 = snap(2.0 + 1.5 * jax.random.normal(ks[3], (1, 48), dtype=jnp.float32))
    check(x2, w2)

    # 3) Packed path with bf16 activations, multi-step grid + partial last block.
    x3 = jax.random.normal(ks[4], (5, 120, 32), dtype=jnp.float32).astype(jnp.bfloat16)
    w3 = snap(2.0 + 1.5 * jax.random.normal(ks[5], (1, 32), dtype=jnp.float32))
    check(x3, w3, atol=5e-3, rtol=5e-3)

    # 4) General path chosen because batch (21) is not a multiple of p=4
    #    (avoids any jnp.pad copy of the activation).
    x4 = snap(jax.random.normal(ks[6], (3, 7, 32), dtype=jnp.float32))
    w4 = snap(2.0 + 1.5 * jax.random.normal(ks[7], (1, 32), dtype=jnp.float32))
    check(x4, w4)

    print("KERNEL_OK")
</pallas_src>

<mosaic_0001>
module attributes {stable_mosaic.version = 11 : i64} {
  func.func @_linear_relu_kernel(%arg0: i32, %arg1: memref<4x128xf32, #tpu.memory_space<vmem>>, %arg2: memref<4x128xf32, #tpu.memory_space<vmem>>, %arg3: memref<4x4xf32, #tpu.memory_space<vmem>>) attributes {dimension_semantics = [#tpu.dimension_semantics<parallel>], iteration_bounds = array<i64: 1>, scalar_prefetch = 0 : i64, scratch_operands = 0 : i64, tpu.core_type = #tpu.core_type<tc>, window_params = [{transform_indices = @transform_0, window_bounds = array<i64: 4, 128>}, {pipeline_mode = #tpu.pipeline_mode<synchronous>, transform_indices = @transform_1, window_bounds = array<i64: 4, 128>}, {transform_indices = @transform_2, window_bounds = array<i64: 4, 4>}]} {
    %c0 = arith.constant 0 : index
    %c0_0 = arith.constant 0 : index
    %0 = vector.load %arg2[%c0, %c0_0] : memref<4x128xf32, #tpu.memory_space<vmem>>, vector<4x128xf32>
    %c0_1 = arith.constant 0 : index
    %c0_2 = arith.constant 0 : index
    %1 = vector.load %arg1[%c0_1, %c0_2] : memref<4x128xf32, #tpu.memory_space<vmem>>, vector<4x128xf32>
    %cst = arith.constant dense<0.000000e+00> : vector<4x4xf32>
    %2 = tpu.matmul %0, %1, %cst {dimension_numbers = #tpu.dot_dimension_numbers<[1], [1], [0], [0], [0, 0, 1, 0], [], []>} : vector<4x128xf32>, vector<4x128xf32>, vector<4x4xf32> -> vector<4x4xf32>
    %cst_3 = arith.constant 0.000000e+00 : f32
    %3 = vector.broadcast %cst_3 : f32 to vector<4x4xf32>
    %4 = arith.maximumf %2, %3 : vector<4x4xf32>
    %c0_4 = arith.constant 0 : index
    %c0_5 = arith.constant 0 : index
    %5 = vector.load %arg3[%c0_4, %c0_5] : memref<4x4xf32, #tpu.memory_space<vmem>>, vector<4x4xf32>
    tpu.vector_store %arg3[%c0_4, %c0_5], %4 {strides = array<i32>} : memref<4x4xf32, #tpu.memory_space<vmem>>, vector<4x4xf32>,
    return
  }
  func.func @transform_0(%arg0: i32) -> (i32, i32) {
    %c0_i32 = arith.constant 0 : i32
    %c0_i32_0 = arith.constant 0 : i32
    return %arg0, %c0_i32 : i32, i32
  }
  func.func @transform_1(%arg0: i32) -> (i32, i32) {
    %c0_i32 = arith.constant 0 : i32
    %c0_i32_0 = arith.constant 0 : i32
    %c0_i32_1 = arith.constant 0 : i32
    return %c0_i32, %c0_i32_0 : i32, i32
  }
  func.func @transform_2(%arg0: i32) -> (i32, i32) {
    %c0_i32 = arith.constant 0 : i32
    %c0_i32_0 = arith.constant 0 : i32
    return %c0_i32, %arg0 : i32, i32
  }
}

</mosaic_0001>

<llo_original>
// kernel: tpu_custom_call.1
$region0: #{tpu_custom_call.1}
  #allocation0 [shape = 'u32[]', space=smem, size = 0x4, offset = 0x4, fixed_abs, tag = 'smem constant byte address 0x4 - core index']
  #allocation1 [shape = 'u32[144,128]{1,0:T(1,128)}', space=vmem, size = 0x12000, scoped, tag = 'internal scratch']
  %s0 = inlined_call_operand.hbm [shape: f32[4,128], index: 0, kind: input, shape index: {}]
  %s1 = inlined_call_operand.hbm [shape: f32[4,128], index: 1, kind: input, shape index: {}]
  %s2 = inlined_call_operand.hbm [shape: f32[4,4], index: 2, kind: output, shape index: {}]
  %s3 = sld [smem:[#allocation0]]
  $region26: #{tpu_custom_call.1} parent=0
    _
  %s5 = ssub.s32 1, %s3
  %s6 = scalar_select 0, %s5, %s3
  $region1: #{tpu_custom_call.1} parent=0
    #allocation2 [shape = 'u8[2048]{0}', space=vmem, size = 0x800, scoped, tag = 'input window, operand 0, single buffered']
    #allocation3 [shape = 's32[1]{0}', space=sflag, size = 0x4, scoped, tag = 'scoped memory for tpu_custom_call.1']
    #allocation4 [shape = 's32[1]{0}', space=sflag, size = 0x4, scoped, tag = 'scoped memory for tpu_custom_call.1']
    #allocation5 [shape = 'u8[2048]{0}', space=vmem, size = 0x800, scoped, tag = 'input window, operand 1, single buffered']
    #allocation6 [shape = 's32[1]{0}', space=sflag, size = 0x4, scoped, tag = 'scoped memory for tpu_custom_call.1']
    #allocation7 [shape = 'u8[2048]{0}', space=vmem, size = 0x800, scoped, tag = 'output window, operand 0, single buffered']
    %7 = vsyncpa [#allocation3], 0
    %8 = vsyncpa [#allocation6], 0
    %9 = vsyncpa [#allocation4], 0
    // Predicated region
    $region2: #{tpu_custom_call.1} parent=1 // pred_check
      _
    $region3: #{tpu_custom_call.1} parent=1 // pred_check_branch
      %11 = sbr.rel (0) target = $region5
    $region4: #{tpu_custom_call.1} parent=1 // pred_region
      %s13 = ssub.s32 64, 64
      %14 = vsyncadd [#allocation3], %s13
      %s16 = sshll.u32 [#allocation2], 4
      %s17 = int_to_ptr.vmem [resolvable:$true] %s16
      %19 = dma.hbm_to_vmem [thread:$0]  %s0, 64, %s17, [#allocation3]
    $region5: #{tpu_custom_call.1} parent=1 // pred_fallthru
      _
    // Predicated region
    $region6: #{tpu_custom_call.1} parent=1 // pred_check
      _
    $region7: #{tpu_custom_call.1} parent=1 // pred_check_branch
      %21 = sbr.rel (0) target = $region9
    $region8: #{tpu_custom_call.1} parent=1 // pred_region
      %s23 = ssub.s32 64, 64
      %24 = vsyncadd [#allocation6], %s23
      %s26 = sshll.u32 [#allocation5], 4
      %s27 = int_to_ptr.vmem [resolvable:$true] %s26
      %29 = dma.hbm_to_vmem [thread:$0]  %s1, 64, %s27, [#allocation6]
    $region9: #{tpu_custom_call.1} parent=1 // pred_fallthru
      _
    // Predicated region
    $region10: #{tpu_custom_call.1} parent=1 // pred_check
      _
    $region11: #{tpu_custom_call.1} parent=1 // pred_check_branch
      %31 = sbr.rel (0) target = $region13
    $region12: #{tpu_custom_call.1} parent=1 // pred_region
      %32 = dma.done [#allocation3], 64
    $region13: #{tpu_custom_call.1} parent=1 // pred_fallthru
      _
    // Predicated region
    $region14: #{tpu_custom_call.1} parent=1 // pred_check
      _
    $region15: #{tpu_custom_call.1} parent=1 // pred_check_branch
      %34 = sbr.rel (0) target = $region17
    $region16: #{tpu_custom_call.1} parent=1 // pred_region
      %35 = dma.done [#allocation6], 64
    $region17: #{tpu_custom_call.1} parent=1 // pred_fallthru
      _
    %v36 = vld [vmem:[#allocation5] sm:$0xf]
    %v37 = vld [vmem:[#allocation2] sm:$0xf]
    %38 = vmatprep.subr.mxu0 0.0
    %39 = vmatpush1.xpose.msra.mxu0 %v37
    %40 = vmatprep.subr.mxu0 0.0
    %41 = vmatpush1.xpose.msra.mxu0 0.0
    %42 = vmatprep.subr.mxu0 0.0
    %43 = vmatpush1.xpose.msra.mxu0 0.0
    %44 = vmatprep.subr.mxu0 0.0
    %45 = vmatpush1.xpose.msra.mxu0 0.0
    %46 = vmatprep.subr.mxu0 0.0
    %47 = vmatpush1.xpose.msra.mxu0 0.0
    %48 = vmatprep.subr.mxu0 0.0
    %49 = vmatpush1.xpose.msra.mxu0 0.0
    %50 = vmatprep.subr.mxu0 0.0
    %51 = vmatpush1.xpose.msra.mxu0 0.0
    %52 = vmatprep.subr.mxu0 0.0
    %53 = vmatpush1.xpose.msra.mxu0 0.0
    %54 = vmatprep.subr.mxu0 0.0
    %55 = vmatpush1.xpose.msra.mxu0 0.0
    %56 = vmatprep.subr.mxu0 0.0
    %57 = vmatpush1.xpose.msra.mxu0 0.0
    %58 = vmatprep.subr.mxu0 0.0
    %59 = vmatpush1.xpose.msra.mxu0 0.0
    %60 = vmatprep.subr.mxu0 0.0
    %61 = vmatpush1.xpose.msra.mxu0 0.0
    %62 = vmatprep.subr.mxu0 0.0
    %63 = vmatpush1.xpose.msra.mxu0 0.0
    %64 = vmatprep.subr.mxu0 0.0
    %65 = vmatpush1.xpose.msra.mxu0 0.0
    %66 = vmatprep.subr.mxu0 0.0
    %67 = vmatpush1.xpose.msra.mxu0 0.0
    %68 = vmatprep.subr.mxu0 0.0
    %69 = vmatpush1.xpose.msra.mxu0 0.0
    %70 = vmatprep.subr.mxu0 0.0
    %71 = vmatpush1.xpose.msra.mxu0 0.0
    %72 = vmatprep.subr.mxu0 0.0
    %73 = vmatpush1.xpose.msra.mxu0 0.0
    %74 = vmatprep.subr.mxu0 0.0
    %75 = vmatpush1.xpose.msra.mxu0 0.0
    %76 = vmatprep.subr.mxu0 0.0
    %77 = vmatpush1.xpose.msra.mxu0 0.0
    %78 = vmatprep.subr.mxu0 0.0
    %79 = vmatpush1.xpose.msra.mxu0 0.0
    %80 = vmatprep.subr.mxu0 0.0
    %81 = vmatpush1.xpose.msra.mxu0 0.0
    %82 = vmatprep.subr.mxu0 0.0
    %83 = vmatpush1.xpose.msra.mxu0 0.0
    %84 = vmatprep.subr.mxu0 0.0
    %85 = vmatpush1.xpose.msra.mxu0 0.0
    %86 = vmatprep.subr.mxu0 0.0
    %87 = vmatpush1.xpose.msra.mxu0 0.0
    %88 = vmatprep.subr.mxu0 0.0
    %89 = vmatpush1.xpose.msra.mxu0 0.0
    %90 = vmatprep.subr.mxu0 0.0
    %91 = vmatpush1.xpose.msra.mxu0 0.0
    %92 = vmatprep.subr.mxu0 0.0
    %93 = vmatpush1.xpose.msra.mxu0 0.0
    %94 = vmatprep.subr.mxu0 0.0
    %95 = vmatpush1.xpose.msra.mxu0 0.0
    %96 = vmatprep.subr.mxu0 0.0
    %97 = vmatpush1.xpose.msra.mxu0 0.0
    %98 = vmatprep.subr.mxu0 0.0
    %99 = vmatpush1.xpose.msra.mxu0 0.0
    %100 = vmatprep.subr.mxu0 0.0
    %101 = vmatpush1.xpose.msra.mxu0 0.0
    %102 = vmatprep.mubr.f32.mxu0 0.0
    %103 = vmatmul.mubr.f32.gmra.mrb[0].mxu0 %v36
    %v104 = vpop.f32.mrb[0].mxu0
    %v105 = vadd.f32 0.0, %v104
    %v106 = vpop.f32.mrb[0].mxu0
    %107 = vdwg.mxu0
    %v108 = vmax.f32 %v105, 0.0
    %vm109 = vcmask 27648
    %110 = vst.msk [vmem:[#allocation7] sm:$0xf] %vm109, %v108
    // Predicated region
    $region18: #{tpu_custom_call.1} parent=1 // pred_check
      _
    $region19: #{tpu_custom_call.1} parent=1 // pred_check_branch
      %112 = sbr.rel (0) target = $region21
    $region20: #{tpu_custom_call.1} parent=1 // pred_region
      %s114 = ssub.s32 64, 64
      %115 = vsyncadd [#allocation4], %s114
      %s117 = sshll.u32 [#allocation7], 4
      %s118 = int_to_ptr.vmem [resolvable:$true] %s117
      %120 = dma.vmem_to_hbm [thread:$0]  %s118, 64, %s2, [#allocation4]
    $region21: #{tpu_custom_call.1} parent=1 // pred_fallthru
      _
    // Predicated region
    $region22: #{tpu_custom_call.1} parent=1 // pred_check
      _
    $region23: #{tpu_custom_call.1} parent=1 // pred_check_branch
      %122 = sbr.rel (0) target = $region25
    $region24: #{tpu_custom_call.1} parent=1 // pred_region
      %123 = dma.done [#allocation4], 64
    $region25: #{tpu_custom_call.1} parent=1 // pred_fallthru
      _
    %124 = vsyncpa [#allocation3], 1
    %125 = vsyncpa [#allocation6], 1
    %126 = vsyncpa [#allocation4], 1

</llo_original>
